<compile_context>
chip_gen: v6e
topology: v6e:2x2x1
jax: 0.10.0
libtpu: 0.0.40
codegen_flags: <defaults>
</compile_context>

<pallas_src>
import functools

import jax
import jax.numpy as jnp
from jax.experimental import pallas as pl
from jax.experimental.pallas import tpu as pltpu


def _round_up(x, m):
    return ((x + m - 1) // m) * m


def _pad_to(a, shape):
    pads = [(0, s - d) for d, s in zip(a.shape, shape)]
    return jnp.pad(a, pads)


# ----------------------------------------------------------------------------- kernel
def _vae_fwd_kernel(
    x_ref, eps_ref,
    w1_ref, b1_ref,          # layer1 with eval-mode BatchNorm folded in
    wh_ref, bh_ref,          # fused [mu | logvar] head, each half padded to Ep lanes
    w3_ref, b3_ref,          # layer3
    w4_ref, b4_ref,          # layer4
    recon_ref, head_ref,
):
    ep = eps_ref.shape[-1]                                           # padded latent dim

    # --- encode --- (BatchNorm folded into w1/b1; dropout1 = identity in eval)
    h = jnp.dot(x_ref[...], w1_ref[...],
                preferred_element_type=jnp.float32) + b1_ref[...]    # (TB, Hp) f32
    h = jnp.maximum(h, 0.0)                                          # ReLU

    # Fused mu/logvar head: one MXU pass, two 128-aligned halves.
    # TODO(synk): head weights are bf16; keep this head f32 if tighter
    # reparameterization fidelity is ever required (it is tiny).
    head = jnp.dot(h.astype(jnp.bfloat16), wh_ref[...],
                   preferred_element_type=jnp.float32) + bh_ref[...]  # (TB, 2*Ep)
    mu = head[:, :ep]
    logvar = head[:, ep:]

    # --- reparameterize ---
    std = jnp.exp(0.5 * logvar)
    z = mu + eps_ref[...] * std                                      # (TB, Ep) f32

    # --- decode --- (dropout2 = identity in eval)
    z1 = jnp.dot(z.astype(jnp.bfloat16), w3_ref[...],
                 preferred_element_type=jnp.float32) + b3_ref[...]   # (TB, Hp)
    z1 = jnp.maximum(z1, 0.0)                                        # ReLU
    z2 = jnp.dot(z1.astype(jnp.bfloat16), w4_ref[...],
                 preferred_element_type=jnp.float32) + b4_ref[...]   # (TB, Fp)

    recon_ref[...] = jax.nn.sigmoid(z2)
    head_ref[...] = head


# ----------------------------------------------------------------------------- wrapper
def prepare_params(params):
    """Fold eval-mode BatchNorm into layer1, fuse the mu/logvar heads, pad lane
    dims to multiples of 128, and cast matmul weights to bf16. Done once,
    outside the kernel."""
    w1, b1 = params["w1"], params["b1"]
    F, H = w1.shape
    E = params["wmu"].shape[1]
    Fp, Hp, Ep = _round_up(F, 128), _round_up(H, 128), _round_up(E, 128)

    # Fold BN (eval): y = gamma * (x@w1 + b1 - mean) * rsqrt(var+eps) + beta
    scale = params["bn_gamma"] * jax.lax.rsqrt(params["bn_var"] + 1e-5)   # (1, H)
    w1f = w1 * scale                                                      # (F, H)
    b1f = (b1 - params["bn_mean"]) * scale + params["bn_beta"]            # (1, H)

    # Fused head: [wmu | wlv], each half zero-padded to Ep lanes.
    wmu_p = _pad_to(params["wmu"], (H, Ep))
    wlv_p = _pad_to(params["wlv"], (H, Ep))
    wh = _pad_to(jnp.concatenate([wmu_p, wlv_p], axis=1), (Hp, 2 * Ep))
    bh = jnp.concatenate([_pad_to(params["bmu"], (1, Ep)),
                          _pad_to(params["blv"], (1, Ep))], axis=1)       # (1, 2Ep)

    prepared = {
        "w1": _pad_to(w1f, (Fp, Hp)).astype(jnp.bfloat16),
        "b1": _pad_to(b1f, (1, Hp)).astype(jnp.float32),
        "wh": wh.astype(jnp.bfloat16),
        "bh": bh.astype(jnp.float32),
        "w3": _pad_to(params["w3"], (Ep, Hp)).astype(jnp.bfloat16),
        "b3": _pad_to(params["b3"], (1, Hp)).astype(jnp.float32),
        "w4": _pad_to(params["w4"], (Hp, Fp)).astype(jnp.bfloat16),
        "b4": _pad_to(params["b4"], (1, Fp)).astype(jnp.float32),
    }
    dims = (F, E, Fp, Hp, Ep)      # plain int tuple -> hashable static arg
    return prepared, dims


def _vmem_limit_bytes(TB, Fp, Hp, Ep):
    """Scoped-VMEM budget: double-buffered weights + streamed tiles + headroom."""
    bf16, f32 = 2, 4
    weights = (Fp * Hp + Hp * 2 * Ep + Ep * Hp + Hp * Fp) * bf16
    biases = (2 * Hp + 2 * Ep + Fp) * f32
    stream_in = TB * Fp * bf16 + TB * Ep * f32
    stream_out = TB * Fp * f32 + TB * 2 * Ep * f32
    total = 2 * (weights + biases + stream_in + stream_out)      # default 2x buffering
    total += 4 * TB * max(Hp, 2 * Ep) * f32                      # intermediates
    total = 2 * total + (4 << 20)                                # headroom
    return int(min(max(total, 16 << 20), 64 << 20))


@functools.partial(jax.jit, static_argnames=("dims", "block_batch"))
def vae_forward(x, eps, prep, *, dims, block_batch=256):
    """VAE forward (training path). Returns (x_reconstructed, mu, logvar)."""
    F, E, Fp, Hp, Ep = dims
    B = x.shape[0]

    # Batch tiling: one full tile for small batches, 256-row tiles (>=2 parallel
    # grid steps, good for v7x megacore) for large batches.
    TB = min(block_batch, _round_up(B, 16))
    Bp = _round_up(B, TB)

    x_p = _pad_to(x, (Bp, Fp)).astype(jnp.bfloat16)        # bf16 stream (MXU input)
    eps_p = _pad_to(eps.astype(jnp.float32), (Bp, Ep))     # f32 (reparam fidelity)

    grid = (Bp // TB,)

    def batch_map(i):
        return (i, 0)

    def resident(i):                       # weights: same block every iteration
        return (0, 0)

    w_specs = [
        pl.BlockSpec((Fp, Hp), resident),       # w1
        pl.BlockSpec((1, Hp), resident),        # b1
        pl.BlockSpec((Hp, 2 * Ep), resident),   # wh
        pl.BlockSpec((1, 2 * Ep), resident),    # bh
        pl.BlockSpec((Ep, Hp), resident),       # w3
        pl.BlockSpec((1, Hp), resident),        # b3
        pl.BlockSpec((Hp, Fp), resident),       # w4
        pl.BlockSpec((1, Fp), resident),        # b4
    ]

    flops = 2 * Bp * (Fp * Hp + Hp * 2 * Ep + Ep * Hp + Hp * Fp)
    transcendentals = Bp * (Ep + Fp)                        # exp(0.5*logvar) + sigmoid
    bytes_accessed = (
        Bp * Fp * 2 + Bp * Ep * 4                           # x (bf16) + eps (f32)
        + (Fp * Hp + Hp * 2 * Ep + Ep * Hp + Hp * Fp) * 2   # bf16 weights
        + (2 * Hp + 2 * Ep + Fp) * 4                        # f32 biases
        + Bp * Fp * 4 + Bp * 2 * Ep * 4                     # recon + fused head out
    )

    recon_p, head_p = pl.pallas_call(
        _vae_fwd_kernel,
        grid=grid,
        in_specs=[
            pl.BlockSpec((TB, Fp), batch_map),   # x
            pl.BlockSpec((TB, Ep), batch_map),   # eps
        ] + w_specs,
        out_specs=(
            pl.BlockSpec((TB, Fp), batch_map),        # recon
            pl.BlockSpec((TB, 2 * Ep), batch_map),    # fused [mu | logvar]
        ),
        out_shape=(
            jax.ShapeDtypeStruct((Bp, Fp), jnp.float32),
            jax.ShapeDtypeStruct((Bp, 2 * Ep), jnp.float32),
        ),
        compiler_params=pltpu.CompilerParams(
            dimension_semantics=("parallel",),
            vmem_limit_bytes=_vmem_limit_bytes(TB, Fp, Hp, Ep),
        ),
        cost_estimate=pl.CostEstimate(
            flops=int(flops),
            transcendentals=int(transcendentals),
            bytes_accessed=int(bytes_accessed),
        ),
    )(
        x_p, eps_p,
        prep["w1"], prep["b1"],
        prep["wh"], prep["bh"],
        prep["w3"], prep["b3"],
        prep["w4"], prep["b4"],
    )

    recon = recon_p[:B, :F]
    mu = head_p[:B, :E]
    logvar = head_p[:B, Ep:Ep + E]
    return recon, mu, logvar


# ----------------------------------------------------------------------------- params / reference
def init_params(key, num_features, hidden_layer, encoded_dimensions):
    """PyTorch-style uniform(+-1/sqrt(fan_in)) init; weights stored (in, out)."""
    ks = jax.random.split(key, 10)

    def lin(kw, kb, fan_in, fan_out):
        bound = 1.0 / jnp.sqrt(float(fan_in))
        w = jax.random.uniform(kw, (fan_in, fan_out), jnp.float32, -bound, bound)
        b = jax.random.uniform(kb, (1, fan_out), jnp.float32, -bound, bound)
        return w, b

    w1, b1 = lin(ks[0], ks[1], num_features, hidden_layer)
    wmu, bmu = lin(ks[2], ks[3], hidden_layer, encoded_dimensions)
    wlv, blv = lin(ks[4], ks[5], hidden_layer, encoded_dimensions)
    w3, b3 = lin(ks[6], ks[7], encoded_dimensions, hidden_layer)
    w4, b4 = lin(ks[8], ks[9], hidden_layer, num_features)

    return {
        "w1": w1, "b1": b1,
        # BatchNorm1d defaults: gamma=1, beta=0, running_mean=0, running_var=1
        "bn_gamma": jnp.ones((1, hidden_layer), jnp.float32),
        "bn_beta": jnp.zeros((1, hidden_layer), jnp.float32),
        "bn_mean": jnp.zeros((1, hidden_layer), jnp.float32),
        "bn_var": jnp.ones((1, hidden_layer), jnp.float32),
        "wmu": wmu, "bmu": bmu,
        "wlv": wlv, "blv": blv,
        "w3": w3, "b3": b3,
        "w4": w4, "b4": b4,
    }


def vae_reference(x, params, eps):
    """Pure-JAX f32 reference with identical semantics (eval BN, identity dropout)."""
    h = x @ params["w1"] + params["b1"]
    inv = jax.lax.rsqrt(params["bn_var"] + 1e-5)
    h = (h - params["bn_mean"]) * inv * params["bn_gamma"] + params["bn_beta"]
    h = jnp.maximum(h, 0.0)
    mu = h @ params["wmu"] + params["bmu"]
    logvar = h @ params["wlv"] + params["blv"]
    z = mu + eps * jnp.exp(0.5 * logvar)
    z1 = jnp.maximum(z @ params["w3"] + params["b3"], 0.0)
    z2 = z1 @ params["w4"] + params["b4"]
    return jax.nn.sigmoid(z2), mu, logvar


# ----------------------------------------------------------------------------- main
if __name__ == "__main__":
    # Small shapes consistent with the module (module defaults: hidden=128, E=11).
    batch = 32
    num_features = 16
    hidden_layer = 128
    encoded_dimensions = 11

    key = jax.random.PRNGKey(0)
    k_x, k_p, k_eps = jax.random.split(key, 3)

    x = jax.random.uniform(k_x, (batch, num_features), jnp.float32)   # sigmoid-range data
    params = init_params(k_p, num_features, hidden_layer, encoded_dimensions)
    eps = jax.random.normal(k_eps, (batch, encoded_dimensions), jnp.float32)

    prep, dims = prepare_params(params)

    # Single clean call: TB = 32 -> grid of 1 batch tile with VMEM-resident weights.
    recon, mu, logvar = vae_forward(x, eps, prep, dims=dims)
    jax.block_until_ready((recon, mu, logvar))

    # Shape / range checks.
    assert recon.shape == (batch, num_features)
    assert mu.shape == (batch, encoded_dimensions)
    assert logvar.shape == (batch, encoded_dimensions)
    assert bool(jnp.all(jnp.isfinite(recon)))
    assert bool(jnp.all((recon >= 0.0) & (recon <= 1.0)))

    # Numerical check vs pure-JAX f32 reference (bf16 weights/x -> loose tolerance).
    r_ref, mu_ref, lv_ref = vae_reference(x, params, eps)
    assert bool(jnp.allclose(recon, r_ref, atol=3e-2, rtol=3e-2))
    assert bool(jnp.allclose(mu, mu_ref, atol=3e-2, rtol=3e-2))
    assert bool(jnp.allclose(logvar, lv_ref, atol=3e-2, rtol=3e-2))

    print("KERNEL_OK")
</pallas_src>

<mosaic_0001>
module attributes {stable_mosaic.version = 11 : i64} {
  func.func @_vae_fwd_kernel(%arg0: i32, %arg1: memref<32x128xbf16, #tpu.memory_space<vmem>>, %arg2: memref<32x128xf32, #tpu.memory_space<vmem>>, %arg3: memref<128x128xbf16, #tpu.memory_space<vmem>>, %arg4: memref<1x128xf32, #tpu.memory_space<vmem>>, %arg5: memref<128x256xbf16, #tpu.memory_space<vmem>>, %arg6: memref<1x256xf32, #tpu.memory_space<vmem>>, %arg7: memref<128x128xbf16, #tpu.memory_space<vmem>>, %arg8: memref<1x128xf32, #tpu.memory_space<vmem>>, %arg9: memref<128x128xbf16, #tpu.memory_space<vmem>>, %arg10: memref<1x128xf32, #tpu.memory_space<vmem>>, %arg11: memref<32x128xf32, #tpu.memory_space<vmem>>, %arg12: memref<32x256xf32, #tpu.memory_space<vmem>>) attributes {dimension_semantics = [#tpu.dimension_semantics<parallel>], iteration_bounds = array<i64: 1>, scalar_prefetch = 0 : i64, scratch_operands = 0 : i64, tpu.core_type = #tpu.core_type<tc>, window_params = [{transform_indices = @transform_0, window_bounds = array<i64: 32, 128>}, {transform_indices = @transform_1, window_bounds = array<i64: 32, 128>}, {pipeline_mode = #tpu.pipeline_mode<synchronous>, transform_indices = @transform_2, window_bounds = array<i64: 128, 128>}, {pipeline_mode = #tpu.pipeline_mode<synchronous>, transform_indices = @transform_3, window_bounds = array<i64: 1, 128>}, {pipeline_mode = #tpu.pipeline_mode<synchronous>, transform_indices = @transform_4, window_bounds = array<i64: 128, 256>}, {pipeline_mode = #tpu.pipeline_mode<synchronous>, transform_indices = @transform_5, window_bounds = array<i64: 1, 256>}, {pipeline_mode = #tpu.pipeline_mode<synchronous>, transform_indices = @transform_6, window_bounds = array<i64: 128, 128>}, {pipeline_mode = #tpu.pipeline_mode<synchronous>, transform_indices = @transform_7, window_bounds = array<i64: 1, 128>}, {pipeline_mode = #tpu.pipeline_mode<synchronous>, transform_indices = @transform_8, window_bounds = array<i64: 128, 128>}, {pipeline_mode = #tpu.pipeline_mode<synchronous>, transform_indices = @transform_9, window_bounds = array<i64: 1, 128>}, {transform_indices = @transform_10, window_bounds = array<i64: 32, 128>}, {transform_indices = @transform_11, window_bounds = array<i64: 32, 256>}]} {
    %c0 = arith.constant 0 : index
    %c0_0 = arith.constant 0 : index
    %0 = vector.load %arg1[%c0, %c0_0] : memref<32x128xbf16, #tpu.memory_space<vmem>>, vector<32x128xbf16>
    %c0_1 = arith.constant 0 : index
    %c0_2 = arith.constant 0 : index
    %1 = vector.load %arg3[%c0_1, %c0_2] : memref<128x128xbf16, #tpu.memory_space<vmem>>, vector<128x128xbf16>
    %cst = arith.constant dense<0.000000e+00> : vector<32x128xf32>
    %2 = tpu.matmul %0, %1, %cst {dimension_numbers = #tpu.dot_dimension_numbers<[1], [0], [0], [1], [0, 0, 1, 1], [], []>} : vector<32x128xbf16>, vector<128x128xbf16>, vector<32x128xf32> -> vector<32x128xf32>
    %c0_3 = arith.constant 0 : index
    %c0_4 = arith.constant 0 : index
    %3 = vector.load %arg4[%c0_3, %c0_4] : memref<1x128xf32, #tpu.memory_space<vmem>>, vector<1x128xf32>
    %4 = vector.broadcast %3 : vector<1x128xf32> to vector<32x128xf32>
    %5 = arith.addf %2, %4 : vector<32x128xf32>
    %cst_5 = arith.constant 0.000000e+00 : f32
    %6 = vector.broadcast %cst_5 : f32 to vector<32x128xf32>
    %7 = arith.maximumf %5, %6 : vector<32x128xf32>
    %8 = arith.truncf %7 : vector<32x128xf32> to vector<32x128xbf16>
    %c0_6 = arith.constant 0 : index
    %c0_7 = arith.constant 0 : index
    %9 = vector.load %arg5[%c0_6, %c0_7] : memref<128x256xbf16, #tpu.memory_space<vmem>>, vector<128x256xbf16>
    %cst_8 = arith.constant dense<0.000000e+00> : vector<32x256xf32>
    %10 = tpu.matmul %8, %9, %cst_8 {dimension_numbers = #tpu.dot_dimension_numbers<[1], [0], [0], [1], [0, 0, 1, 1], [], []>} : vector<32x128xbf16>, vector<128x256xbf16>, vector<32x256xf32> -> vector<32x256xf32>
    %c0_9 = arith.constant 0 : index
    %c0_10 = arith.constant 0 : index
    %11 = vector.load %arg6[%c0_9, %c0_10] : memref<1x256xf32, #tpu.memory_space<vmem>>, vector<1x256xf32>
    %12 = vector.broadcast %11 : vector<1x256xf32> to vector<32x256xf32>
    %13 = arith.addf %10, %12 : vector<32x256xf32>
    %14 = vector.extract_strided_slice %13 {offsets = [0, 0], sizes = [32, 128], strides = [1, 1]} : vector<32x256xf32> to vector<32x128xf32>
    %15 = vector.extract_strided_slice %13 {offsets = [0, 128], sizes = [32, 128], strides = [1, 1]} : vector<32x256xf32> to vector<32x128xf32>
    %cst_11 = arith.constant 5.000000e-01 : f32
    %16 = vector.broadcast %cst_11 : f32 to vector<32x128xf32>
    %17 = arith.mulf %16, %15 : vector<32x128xf32>
    %18 = math.exp %17 : vector<32x128xf32>
    %c0_12 = arith.constant 0 : index
    %c0_13 = arith.constant 0 : index
    %19 = vector.load %arg2[%c0_12, %c0_13] : memref<32x128xf32, #tpu.memory_space<vmem>>, vector<32x128xf32>
    %20 = arith.mulf %19, %18 : vector<32x128xf32>
    %21 = arith.addf %14, %20 : vector<32x128xf32>
    %22 = arith.truncf %21 : vector<32x128xf32> to vector<32x128xbf16>
    %c0_14 = arith.constant 0 : index
    %c0_15 = arith.constant 0 : index
    %23 = vector.load %arg7[%c0_14, %c0_15] : memref<128x128xbf16, #tpu.memory_space<vmem>>, vector<128x128xbf16>
    %cst_16 = arith.constant dense<0.000000e+00> : vector<32x128xf32>
    %24 = tpu.matmul %22, %23, %cst_16 {dimension_numbers = #tpu.dot_dimension_numbers<[1], [0], [0], [1], [0, 0, 1, 1], [], []>} : vector<32x128xbf16>, vector<128x128xbf16>, vector<32x128xf32> -> vector<32x128xf32>
    %c0_17 = arith.constant 0 : index
    %c0_18 = arith.constant 0 : index
    %25 = vector.load %arg8[%c0_17, %c0_18] : memref<1x128xf32, #tpu.memory_space<vmem>>, vector<1x128xf32>
    %26 = vector.broadcast %25 : vector<1x128xf32> to vector<32x128xf32>
    %27 = arith.addf %24, %26 : vector<32x128xf32>
    %cst_19 = arith.constant 0.000000e+00 : f32
    %28 = vector.broadcast %cst_19 : f32 to vector<32x128xf32>
    %29 = arith.maximumf %27, %28 : vector<32x128xf32>
    %30 = arith.truncf %29 : vector<32x128xf32> to vector<32x128xbf16>
    %c0_20 = arith.constant 0 : index
    %c0_21 = arith.constant 0 : index
    %31 = vector.load %arg9[%c0_20, %c0_21] : memref<128x128xbf16, #tpu.memory_space<vmem>>, vector<128x128xbf16>
    %cst_22 = arith.constant dense<0.000000e+00> : vector<32x128xf32>
    %32 = tpu.matmul %30, %31, %cst_22 {dimension_numbers = #tpu.dot_dimension_numbers<[1], [0], [0], [1], [0, 0, 1, 1], [], []>} : vector<32x128xbf16>, vector<128x128xbf16>, vector<32x128xf32> -> vector<32x128xf32>
    %c0_23 = arith.constant 0 : index
    %c0_24 = arith.constant 0 : index
    %33 = vector.load %arg10[%c0_23, %c0_24] : memref<1x128xf32, #tpu.memory_space<vmem>>, vector<1x128xf32>
    %34 = vector.broadcast %33 : vector<1x128xf32> to vector<32x128xf32>
    %35 = arith.addf %32, %34 : vector<32x128xf32>
    %36 = arith.negf %35 : vector<32x128xf32>
    %37 = math.exp %36 : vector<32x128xf32>
    %cst_25 = arith.constant 1.000000e+00 : f32
    %38 = vector.broadcast %cst_25 : f32 to vector<32x128xf32>
    %39 = arith.addf %38, %37 : vector<32x128xf32>
    %40 = arith.divf %38, %39 : vector<32x128xf32>
    %c0_26 = arith.constant 0 : index
    %c0_27 = arith.constant 0 : index
    %41 = vector.load %arg11[%c0_26, %c0_27] : memref<32x128xf32, #tpu.memory_space<vmem>>, vector<32x128xf32>
    tpu.vector_store %arg11[%c0_26, %c0_27], %40 {strides = array<i32>} : memref<32x128xf32, #tpu.memory_space<vmem>>, vector<32x128xf32>,
    %c0_28 = arith.constant 0 : index
    %c0_29 = arith.constant 0 : index
    %42 = vector.load %arg12[%c0_28, %c0_29] : memref<32x256xf32, #tpu.memory_space<vmem>>, vector<32x256xf32>
    tpu.vector_store %arg12[%c0_28, %c0_29], %13 {strides = array<i32>} : memref<32x256xf32, #tpu.memory_space<vmem>>, vector<32x256xf32>,
    return
  }
  func.func @transform_0(%arg0: i32) -> (i32, i32) {
    %c0_i32 = arith.constant 0 : i32
    %c0_i32_0 = arith.constant 0 : i32
    return %arg0, %c0_i32 : i32, i32
  }
  func.func @transform_1(%arg0: i32) -> (i32, i32) {
    %c0_i32 = arith.constant 0 : i32
    %c0_i32_0 = arith.constant 0 : i32
    return %arg0, %c0_i32 : i32, i32
  }
  func.func @transform_2(%arg0: i32) -> (i32, i32) {
    %c0_i32 = arith.constant 0 : i32
    %c0_i32_0 = arith.constant 0 : i32
    %c0_i32_1 = arith.constant 0 : i32
    return %c0_i32, %c0_i32_0 : i32, i32
  }
  func.func @transform_3(%arg0: i32) -> (i32, i32) {
    %c0_i32 = arith.constant 0 : i32
    %c0_i32_0 = arith.constant 0 : i32
    %c0_i32_1 = arith.constant 0 : i32
    return %c0_i32, %c0_i32_0 : i32, i32
  }
  func.func @transform_4(%arg0: i32) -> (i32, i32) {
    %c0_i32 = arith.constant 0 : i32
    %c0_i32_0 = arith.constant 0 : i32
    %c0_i32_1 = arith.constant 0 : i32
    return %c0_i32, %c0_i32_0 : i32, i32
  }
  func.func @transform_5(%arg0: i32) -> (i32, i32) {
    %c0_i32 = arith.constant 0 : i32
    %c0_i32_0 = arith.constant 0 : i32
    %c0_i32_1 = arith.constant 0 : i32
    return %c0_i32, %c0_i32_0 : i32, i32
  }
  func.func @transform_6(%arg0: i32) -> (i32, i32) {
    %c0_i32 = arith.constant 0 : i32
    %c0_i32_0 = arith.constant 0 : i32
    %c0_i32_1 = arith.constant 0 : i32
    return %c0_i32, %c0_i32_0 : i32, i32
  }
  func.func @transform_7(%arg0: i32) -> (i32, i32) {
    %c0_i32 = arith.constant 0 : i32
    %c0_i32_0 = arith.constant 0 : i32
    %c0_i32_1 = arith.constant 0 : i32
    return %c0_i32, %c0_i32_0 : i32, i32
  }
  func.func @transform_8(%arg0: i32) -> (i32, i32) {
    %c0_i32 = arith.constant 0 : i32
    %c0_i32_0 = arith.constant 0 : i32
    %c0_i32_1 = arith.constant 0 : i32
    return %c0_i32, %c0_i32_0 : i32, i32
  }
  func.func @transform_9(%arg0: i32) -> (i32, i32) {
    %c0_i32 = arith.constant 0 : i32
    %c0_i32_0 = arith.constant 0 : i32
    %c0_i32_1 = arith.constant 0 : i32
    return %c0_i32, %c0_i32_0 : i32, i32
  }
  func.func @transform_10(%arg0: i32) -> (i32, i32) {
    %c0_i32 = arith.constant 0 : i32
    %c0_i32_0 = arith.constant 0 : i32
    return %arg0, %c0_i32 : i32, i32
  }
  func.func @transform_11(%arg0: i32) -> (i32, i32) {
    %c0_i32 = arith.constant 0 : i32
    %c0_i32_0 = arith.constant 0 : i32
    return %arg0, %c0_i32 : i32, i32
  }
}

</mosaic_0001>

<llo_original>
// kernel: vae_forward.1
$region0: #{vae_forward.1}
  #allocation0 [shape = 'u32[]', space=smem, size = 0x4, offset = 0x4, fixed_abs, tag = 'smem constant byte address 0x4 - core index']
  #allocation1 [shape = 'u32[144,128]{1,0:T(1,128)}', space=vmem, size = 0x12000, scoped, tag = 'internal scratch']
  %s0 = inlined_call_operand.vmem [shape: bf16[32,128], index: 0, kind: input, shape index: {}]
  %s1 = inlined_call_operand.vmem [shape: f32[32,128], index: 1, kind: input, shape index: {}]
  %s2 = inlined_call_operand.vmem [shape: bf16[128,128], index: 2, kind: input, shape index: {}]
  %s3 = inlined_call_operand.vmem [shape: f32[1,128], index: 3, kind: input, shape index: {}]
  %s4 = inlined_call_operand.vmem [shape: bf16[128,256], index: 4, kind: input, shape index: {}]
  %s5 = inlined_call_operand.vmem [shape: f32[1,256], index: 5, kind: input, shape index: {}]
  %s6 = inlined_call_operand.hbm [shape: bf16[128,128], index: 6, kind: input, shape index: {}]
  %s7 = inlined_call_operand.vmem [shape: f32[1,128], index: 7, kind: input, shape index: {}]
  %s8 = inlined_call_operand.hbm [shape: bf16[128,128], index: 8, kind: input, shape index: {}]
  %s9 = inlined_call_operand.vmem [shape: f32[1,128], index: 9, kind: input, shape index: {}]
  %s10 = inlined_call_operand.vmem [shape: f32[32,128], index: 10, kind: output, shape index: {0}]
  %s11 = inlined_call_operand.vmem [shape: f32[32,256], index: 11, kind: output, shape index: {1}]
  %12 = xla_tuple %s10, %s11
  %s13 = sld [smem:[#allocation0]]
  $region66: #{vae_forward.1} parent=0
    _
  %s15 = ssub.s32 1, %s13
  %s16 = scalar_select 0, %s15, %s13
  $region1: #{vae_forward.1} parent=0
    #allocation2 [shape = 'u8[32768]{0}', space=vmem, size = 0x8000, scoped, tag = 'input window, operand 6, single buffered']
    #allocation3 [shape = 's32[1]{0}', space=sflag, size = 0x4, scoped, tag = 'scoped memory for vae_forward.1']
    #allocation4 [shape = 'u8[32768]{0}', space=vmem, size = 0x8000, scoped, tag = 'input window, operand 8, single buffered']
    #allocation5 [shape = 's32[1]{0}', space=sflag, size = 0x4, scoped, tag = 'scoped memory for vae_forward.1']
    %17 = vsyncpa [#allocation3], 0
    %18 = vsyncpa [#allocation5], 0
    // Predicated region
    $region2: #{vae_forward.1} parent=1 // pred_check
      _
    $region3: #{vae_forward.1} parent=1 // pred_check_branch
      %20 = sbr.rel (0) target = $region5
    $region4: #{vae_forward.1} parent=1 // pred_region
      _
    $region5: #{vae_forward.1} parent=1 // pred_fallthru
      _
    // Predicated region
    $region6: #{vae_forward.1} parent=1 // pred_check
      _
    $region7: #{vae_forward.1} parent=1 // pred_check_branch
      %22 = sbr.rel (0) target = $region9
    $region8: #{vae_forward.1} parent=1 // pred_region
      _
    $region9: #{vae_forward.1} parent=1 // pred_fallthru
      _
    // Predicated region
    $region10: #{vae_forward.1} parent=1 // pred_check
      _
    $region11: #{vae_forward.1} parent=1 // pred_check_branch
      %24 = sbr.rel (0) target = $region13
    $region12: #{vae_forward.1} parent=1 // pred_region
      _
    $region13: #{vae_forward.1} parent=1 // pred_fallthru
      _
    // Predicated region
    $region14: #{vae_forward.1} parent=1 // pred_check
      _
    $region15: #{vae_forward.1} parent=1 // pred_check_branch
      %26 = sbr.rel (0) target = $region17
    $region16: #{vae_forward.1} parent=1 // pred_region
      _
    $region17: #{vae_forward.1} parent=1 // pred_fallthru
      _
    // Predicated region
    $region18: #{vae_forward.1} parent=1 // pred_check
      _
    $region19: #{vae_forward.1} parent=1 // pred_check_branch
      %28 = sbr.rel (0) target = $region21
    $region20: #{vae_forward.1} parent=1 // pred_region
      _
    $region21: #{vae_forward.1} parent=1 // pred_fallthru
      _
    // Predicated region
    $region22: #{vae_forward.1} parent=1 // pred_check
      _
    $region23: #{vae_forward.1} parent=1 // pred_check_branch
      %30 = sbr.rel (0) target = $region25
    $region24: #{vae_forward.1} parent=1 // pred_region
      _
    $region25: #{vae_forward.1} parent=1 // pred_fallthru
      _
    // Predicated region
    $region26: #{vae_forward.1} parent=1 // pred_check
      _
    $region27: #{vae_forward.1} parent=1 // pred_check_branch
      %32 = sbr.rel (0) target = $region29
    $region28: #{vae_forward.1} parent=1 // pred_region
      %s34 = ssub.s32 1024, 1024
      %35 = vsyncadd [#allocation3], %s34
      %s36 = sshll.u32 [#allocation2], 4
      %s37 = int_to_ptr.vmem [resolvable:$true] %s36
      %42 = dma.hbm_to_vmem [thread:$0]  %s6, 1024, %s37, [#allocation3], 64, 64, 4
    $region29: #{vae_forward.1} parent=1 // pred_fallthru
      _
    // Predicated region
    $region30: #{vae_forward.1} parent=1 // pred_check
      _
    $region31: #{vae_forward.1} parent=1 // pred_check_branch
      %44 = sbr.rel (0) target = $region33
    $region32: #{vae_forward.1} parent=1 // pred_region
      _
    $region33: #{vae_forward.1} parent=1 // pred_fallthru
      _
    // Predicated region
    $region34: #{vae_forward.1} parent=1 // pred_check
      _
    $region35: #{vae_forward.1} parent=1 // pred_check_branch
      %46 = sbr.rel (0) target = $region37
    $region36: #{vae_forward.1} parent=1 // pred_region
      %s48 = ssub.s32 1024, 1024
      %49 = vsyncadd [#allocation5], %s48
      %s50 = sshll.u32 [#allocation4], 4
      %s51 = int_to_ptr.vmem [resolvable:$true] %s50
      %56 = dma.hbm_to_vmem [thread:$0]  %s8, 1024, %s51, [#allocation5], 64, 64, 4
    $region37: #{vae_forward.1} parent=1 // pred_fallthru
      _
    // Predicated region
    $region38: #{vae_forward.1} parent=1 // pred_check
      _
    $region39: #{vae_forward.1} parent=1 // pred_check_branch
      %58 = sbr.rel (0) target = $region41
    $region40: #{vae_forward.1} parent=1 // pred_region
      _
    $region41: #{vae_forward.1} parent=1 // pred_fallthru
      _
    // Predicated region
    $region42: #{vae_forward.1} parent=1 // pred_check
      _
    $region43: #{vae_forward.1} parent=1 // pred_check_branch
      %60 = sbr.rel (0) target = $region45
    $region44: #{vae_forward.1} parent=1 // pred_region
      %61 = dma.done [#allocation3], 1024
    $region45: #{vae_forward.1} parent=1 // pred_fallthru
      _
    // Predicated region
    $region46: #{vae_forward.1} parent=1 // pred_check
      _
    $region47: #{vae_forward.1} parent=1 // pred_check_branch
      %63 = sbr.rel (0) target = $region49
    $region48: #{vae_forward.1} parent=1 // pred_region
      %64 = dma.done [#allocation5], 1024
    $region49: #{vae_forward.1} parent=1 // pred_fallthru
      _
    %v66 = vld [vmem:[%s0] sm:$0xf]
    %v67 = vld [vmem:[%s0 + $0x4] sm:$0xf]
    %v68 = vld [vmem:[%s0 + $0x8] sm:$0xf]
    %v69 = vld [vmem:[%s0 + $0xc] sm:$0xf]
    %v70 = vld [vmem:[%s2] sm:$0xf]
    %v71 = vld [vmem:[%s2 + $0x4] sm:$0xf]
    %v72 = vld [vmem:[%s2 + $0x8] sm:$0xf]
    %v73 = vld [vmem:[%s2 + $0xc] sm:$0xf]
    %v74 = vld [vmem:[%s2 + $0x10] sm:$0xf]
    %v75 = vld [vmem:[%s2 + $0x14] sm:$0xf]
    %v76 = vld [vmem:[%s2 + $0x18] sm:$0xf]
    %v77 = vld [vmem:[%s2 + $0x1c] sm:$0xf]
    %v78 = vld [vmem:[%s2 + $0x20] sm:$0xf]
    %v79 = vld [vmem:[%s2 + $0x24] sm:$0xf]
    %v80 = vld [vmem:[%s2 + $0x28] sm:$0xf]
    %v81 = vld [vmem:[%s2 + $0x2c] sm:$0xf]
    %v82 = vld [vmem:[%s2 + $0x30] sm:$0xf]
    %v83 = vld [vmem:[%s2 + $0x34] sm:$0xf]
    %v84 = vld [vmem:[%s2 + $0x38] sm:$0xf]
    %v85 = vld [vmem:[%s2 + $0x3c] sm:$0xf]
    %v86 = vld [vmem:[%s3] sm:$0x1]
    %v88 = vlaneseq
    %v89 = vshrl.u32 %v88, 7
    %v90 = vsub.s32 0, %v89
    %v91 = vrot.slane %v86, %v90
    %v97 = vunpack.c.l.b16 %v66
    %v98 = vunpack.c.l.b16 %v67
    %v99 = vunpack.c.l.b16 %v68
    %v100 = vunpack.c.l.b16 %v69
    %v101 = vpack.c.b16 %v98, %v97
    %v102 = vpack.c.b16 %v100, %v99
    %v121 = vunpack.c.l.b16 %v70
    %v122 = vunpack.c.l.b16 %v71
    %v123 = vunpack.c.l.b16 %v72
    %v124 = vunpack.c.l.b16 %v73
    %v125 = vunpack.c.l.b16 %v74
    %v126 = vunpack.c.l.b16 %v75
    %v127 = vunpack.c.l.b16 %v76
    %v128 = vunpack.c.l.b16 %v77
    %v129 = vunpack.c.l.b16 %v78
    %v130 = vunpack.c.l.b16 %v79
    %v131 = vunpack.c.l.b16 %v80
    %v132 = vunpack.c.l.b16 %v81
    %v133 = vunpack.c.l.b16 %v82
    %v134 = vunpack.c.l.b16 %v83
    %v135 = vunpack.c.l.b16 %v84
    %v136 = vunpack.c.l.b16 %v85
    %v137 = vpack.c.b16 %v122, %v121
    %v138 = vpack.c.b16 %v124, %v123
    %v139 = vpack.c.b16 %v126, %v125
    %v140 = vpack.c.b16 %v128, %v127
    %v141 = vpack.c.b16 %v130, %v129
    %v142 = vpack.c.b16 %v132, %v131
    %v143 = vpack.c.b16 %v134, %v133
    %v144 = vpack.c.b16 %v136, %v135
    %153 = vmatprep.subr.bf16.mxu0 0
    %154 = vmatpush1.bf16.msra.mxu0 %v144
    %155 = vmatprep.subr.bf16.mxu0 0
    %156 = vmatpush1.bf16.msra.mxu0 %v143
    %157 = vmatprep.subr.bf16.mxu0 0
    %158 = vmatpush1.bf16.msra.mxu0 %v142
    %159 = vmatprep.subr.bf16.mxu0 0
    %160 = vmatpush1.bf16.msra.mxu0 %v141
    %161 = vmatprep.subr.bf16.mxu0 0
    %162 = vmatpush1.bf16.msra.mxu0 %v140
    %163 = vmatprep.subr.bf16.mxu0 0
    %164 = vmatpush1.bf16.msra.mxu0 %v139
    %165 = vmatprep.subr.bf16.mxu0 0
    %166 = vmatpush1.bf16.msra.mxu0 %v138
    %167 = vmatprep.subr.bf16.mxu0 0
    %168 = vmatpush1.bf16.msra.mxu0 %v137
    %169 = vmatprep.subr.bf16.mxu0 0
    %170 = vmatpush2.bf16.msra.mxu0 0
    %171 = vmatprep.subr.bf16.mxu0 0
    %172 = vmatpush2.bf16.msra.mxu0 0
    %173 = vmatprep.subr.bf16.mxu0 0
    %174 = vmatpush2.bf16.msra.mxu0 0
    %175 = vmatprep.subr.bf16.mxu0 0
    %176 = vmatpush2.bf16.msra.mxu0 0
    %177 = vmatprep.subr.bf16.mxu0 0
    %178 = vmatpush2.bf16.msra.mxu0 0
    %179 = vmatprep.subr.bf16.mxu0 0
    %180 = vmatpush2.bf16.msra.mxu0 0
    %181 = vmatprep.subr.bf16.mxu0 0
    %182 = vmatpush2.bf16.msra.mxu0 0
    %183 = vmatprep.subr.bf16.mxu0 0
    %184 = vmatpush2.bf16.msra.mxu0 0
    %185 = vmatprep.mubr.bf16.mxu0 0
    %186 = vmatmul.mubr.bf16.gmra.mxu0 %v101
    %v187 = vpop.f32.mrf.mxu0
    %v188 = vadd.f32 %v91, %v187
    %v189 = vpop.f32.mrf.mxu0
    %v190 = vpop.f32.mrf.mxu0
    %v191 = vadd.f32 %v91, %v190
    %v192 = vpop.f32.mrf.mxu0
    %193 = vmatprep.mubr.bf16.mxu0 0
    %194 = vmatmul.mubr.bf16.gmra.mxu0 %v102
    %v195 = vpop.f32.mrf.mxu0
    %v196 = vadd.f32 %v91, %v195
    %v197 = vpop.f32.mrf.mxu0
    %v198 = vpop.f32.mrf.mxu0
    %v199 = vadd.f32 %v91, %v198
    %v200 = vpop.f32.mrf.mxu0
    %201 = vdwg.mxu0
    %v202 = vmax.f32 %v188, 0.0
    %v203 = vmax.f32 %v191, 0.0
    %v204 = vmax.f32 %v196, 0.0
    %v205 = vmax.f32 %v199, 0.0
    %v206 = vpack.c.bf16 %v203, %v202
    %v207 = vpack.c.bf16 %v205, %v204
    %v208 = vld [vmem:[%s4] sm:$0xff]
    %v209 = vld [vmem:[%s4 + $0x8] sm:$0xff]
    %v210 = vld [vmem:[%s4 + $0x10] sm:$0xff]
    %v211 = vld [vmem:[%s4 + $0x18] sm:$0xff]
    %v212 = vld [vmem:[%s4 + $0x20] sm:$0xff]
    %v213 = vld [vmem:[%s4 + $0x28] sm:$0xff]
    %v214 = vld [vmem:[%s4 + $0x30] sm:$0xff]
    %v215 = vld [vmem:[%s4 + $0x38] sm:$0xff]
    %v216 = vld [vmem:[%s4 + $0x40] sm:$0xff]
    %v217 = vld [vmem:[%s4 + $0x48] sm:$0xff]
    %v218 = vld [vmem:[%s4 + $0x50] sm:$0xff]
    %v219 = vld [vmem:[%s4 + $0x58] sm:$0xff]
    %v220 = vld [vmem:[%s4 + $0x60] sm:$0xff]
    %v221 = vld [vmem:[%s4 + $0x68] sm:$0xff]
    %v222 = vld [vmem:[%s4 + $0x70] sm:$0xff]
    %v223 = vld [vmem:[%s4 + $0x78] sm:$0xff]
    %v224 = vld [vmem:[%s5] sm:$0x3]
    %v226 = vlaneseq
    %v227 = vshrl.u32 %v226, 7
    %v228 = vsub.s32 0, %v227
    %v229 = vrot.slane %v224, %v228
    %v230 = vlaneseq
    %v231 = vshrl.u32 %v230, 7
    %v232 = vsub.s32 1, %v231
    %v233 = vrot.slane %v224, %v232
    %v252 = vunpack.c.l.b16 %v208
    %v253 = vunpack.c.h.b16 %v208
    %v254 = vunpack.c.l.b16 %v209
    %v255 = vunpack.c.h.b16 %v209
    %v256 = vunpack.c.l.b16 %v210
    %v257 = vunpack.c.h.b16 %v210
    %v258 = vunpack.c.l.b16 %v211
    %v259 = vunpack.c.h.b16 %v211
    %v260 = vunpack.c.l.b16 %v212
    %v261 = vunpack.c.h.b16 %v212
    %v262 = vunpack.c.l.b16 %v213
    %v263 = vunpack.c.h.b16 %v213
    %v264 = vunpack.c.l.b16 %v214
    %v265 = vunpack.c.h.b16 %v214
    %v266 = vunpack.c.l.b16 %v215
    %v267 = vunpack.c.h.b16 %v215
    %v268 = vunpack.c.l.b16 %v216
    %v269 = vunpack.c.h.b16 %v216
    %v270 = vunpack.c.l.b16 %v217
    %v271 = vunpack.c.h.b16 %v217
    %v272 = vunpack.c.l.b16 %v218
    %v273 = vunpack.c.h.b16 %v218
    %v274 = vunpack.c.l.b16 %v219
    %v275 = vunpack.c.h.b16 %v219
    %v276 = vunpack.c.l.b16 %v220
    %v277 = vunpack.c.h.b16 %v220
    %v278 = vunpack.c.l.b16 %v221
    %v279 = vunpack.c.h.b16 %v221
    %v280 = vunpack.c.l.b16 %v222
    %v281 = vunpack.c.h.b16 %v222
    %v282 = vunpack.c.l.b16 %v223
    %v283 = vunpack.c.h.b16 %v223
    %v284 = vpack.c.b16 %v254, %v252
    %v285 = vpack.c.b16 %v255, %v253
    %v286 = vpack.c.b16 %v258, %v256
    %v287 = vpack.c.b16 %v259, %v257
    %v288 = vpack.c.b16 %v262, %v260
    %v289 = vpack.c.b16 %v263, %v261
    %v290 = vpack.c.b16 %v266, %v264
    %v291 = vpack.c.b16 %v267, %v265
    %v292 = vpack.c.b16 %v270, %v268
    %v293 = vpack.c.b16 %v271, %v269
    %v294 = vpack.c.b16 %v274, %v272
    %v295 = vpack.c.b16 %v275, %v273
    %v296 = vpack.c.b16 %v278, %v276
    %v297 = vpack.c.b16 %v279, %v277
    %v298 = vpack.c.b16 %v282, %v280
    %v299 = vpack.c.b16 %v283, %v281
    %316 = vmatprep.subr.bf16.mxu0 %v299
    %317 = vmatpush1.bf16.msra.mxu0 %v298
    %318 = vmatprep.subr.bf16.mxu0 %v297
    %319 = vmatpush1.bf16.msra.mxu0 %v296
    %320 = vmatprep.subr.bf16.mxu0 %v295
    %321 = vmatpush1.bf16.msra.mxu0 %v294
    %322 = vmatprep.subr.bf16.mxu0 %v293
    %323 = vmatpush1.bf16.msra.mxu0 %v292
    %324 = vmatprep.subr.bf16.mxu0 %v291
    %325 = vmatpush1.bf16.msra.mxu0 %v290
    %326 = vmatprep.subr.bf16.mxu0 %v289
    %327 = vmatpush1.bf16.msra.mxu0 %v288
    %328 = vmatprep.subr.bf16.mxu0 %v287
    %329 = vmatpush1.bf16.msra.mxu0 %v286
    %330 = vmatprep.subr.bf16.mxu0 %v285
    %331 = vmatpush1.bf16.msra.mxu0 %v284
    %332 = vmatprep.subr.bf16.mxu0 0
    %333 = vmatpush2.bf16.msra.mxu0 0
    %334 = vmatprep.subr.bf16.mxu0 0
    %335 = vmatpush2.bf16.msra.mxu0 0
    %336 = vmatprep.subr.bf16.mxu0 0
    %337 = vmatpush2.bf16.msra.mxu0 0
    %338 = vmatprep.subr.bf16.mxu0 0
    %339 = vmatpush2.bf16.msra.mxu0 0
    %340 = vmatprep.subr.bf16.mxu0 0
    %341 = vmatpush2.bf16.msra.mxu0 0
    %342 = vmatprep.subr.bf16.mxu0 0
    %343 = vmatpush2.bf16.msra.mxu0 0
    %344 = vmatprep.subr.bf16.mxu0 0
    %345 = vmatpush2.bf16.msra.mxu0 0
    %346 = vmatprep.subr.bf16.mxu0 0
    %347 = vmatpush2.bf16.msra.mxu0 0
    %348 = vmatprep.mubr.bf16.mxu0 0
    %349 = vmatmul.mubr.bf16.gmra.mxu0 %v206
    %v350 = vpop.f32.mrf.mxu0
    %v351 = vadd.f32 %v229, %v350
    %v352 = vpop.f32.mrf.mxu0
    %v353 = vadd.f32 %v233, %v352
    %v354 = vpop.f32.mrf.mxu0
    %v355 = vadd.f32 %v229, %v354
    %v356 = vpop.f32.mrf.mxu0
    %v357 = vadd.f32 %v233, %v356
    %358 = vmatprep.mubr.bf16.mxu0 0
    %359 = vmatmul.mubr.bf16.gmra.mxu0 %v207
    %v360 = vpop.f32.mrf.mxu0
    %v361 = vadd.f32 %v229, %v360
    %v362 = vpop.f32.mrf.mxu0
    %v363 = vadd.f32 %v233, %v362
    %v364 = vpop.f32.mrf.mxu0
    %v365 = vadd.f32 %v229, %v364
    %v366 = vpop.f32.mrf.mxu0
    %v367 = vadd.f32 %v233, %v366
    %368 = vdwg.mxu0
    %v369 = vmul.f32 %v353, 0.5
    %v370 = vmul.f32 %v357, 0.5
    %v371 = vmul.f32 %v363, 0.5
    %v372 = vmul.f32 %v367, 0.5
    %v373 = vmul.f32 %v369, 1.442695
    %v374 = vpow.pop %v373
    %v375 = vmul.f32 %v370, 1.442695
    %v376 = vpow.pop %v375
    %v377 = vmul.f32 %v371, 1.442695
    %v378 = vpow.pop %v377
    %v379 = vmul.f32 %v372, 1.442695
    %v380 = vpow.pop %v379
    %v381 = vld [vmem:[%s1] sm:$0xff]
    %v382 = vld [vmem:[%s1 + $0x8] sm:$0xff]
    %v383 = vld [vmem:[%s1 + $0x10] sm:$0xff]
    %v384 = vld [vmem:[%s1 + $0x18] sm:$0xff]
    %v385 = vmul.f32 %v381, %v374
    %v386 = vmul.f32 %v382, %v376
    %v387 = vmul.f32 %v383, %v378
    %v388 = vmul.f32 %v384, %v380
    %v389 = vadd.f32 %v351, %v385
    %v390 = vadd.f32 %v355, %v386
    %v391 = vadd.f32 %v361, %v387
    %v392 = vadd.f32 %v365, %v388
    %v393 = vpack.c.bf16 %v390, %v389
    %v394 = vpack.c.bf16 %v392, %v391
    %v395 = vld [vmem:[#allocation2] sm:$0xf]
    %v396 = vld [vmem:[#allocation2 + $0x4] sm:$0xf]
    %v397 = vld [vmem:[#allocation2 + $0x8] sm:$0xf]
    %v398 = vld [vmem:[#allocation2 + $0xc] sm:$0xf]
    %v399 = vld [vmem:[#allocation2 + $0x10] sm:$0xf]
    %v400 = vld [vmem:[#allocation2 + $0x14] sm:$0xf]
    %v401 = vld [vmem:[#allocation2 + $0x18] sm:$0xf]
    %v402 = vld [vmem:[#allocation2 + $0x1c] sm:$0xf]
    %v403 = vld [vmem:[#allocation2 + $0x20] sm:$0xf]
    %v404 = vld [vmem:[#allocation2 + $0x24] sm:$0xf]
    %v405 = vld [vmem:[#allocation2 + $0x28] sm:$0xf]
    %v406 = vld [vmem:[#allocation2 + $0x2c] sm:$0xf]
    %v407 = vld [vmem:[#allocation2 + $0x30] sm:$0xf]
    %v408 = vld [vmem:[#allocation2 + $0x34] sm:$0xf]
    %v409 = vld [vmem:[#allocation2 + $0x38] sm:$0xf]
    %v410 = vld [vmem:[#allocation2 + $0x3c] sm:$0xf]
    %v411 = vld [vmem:[%s7] sm:$0x1]
    %v413 = vlaneseq
    %v414 = vshrl.u32 %v413, 7
    %v415 = vsub.s32 0, %v414
    %v416 = vrot.slane %v411, %v415
    %v434 = vunpack.c.l.b16 %v395
    %v435 = vunpack.c.l.b16 %v396
    %v436 = vunpack.c.l.b16 %v397
    %v437 = vunpack.c.l.b16 %v398
    %v438 = vunpack.c.l.b16 %v399
    %v439 = vunpack.c.l.b16 %v400
    %v440 = vunpack.c.l.b16 %v401
    %v441 = vunpack.c.l.b16 %v402
    %v442 = vunpack.c.l.b16 %v403
    %v443 = vunpack.c.l.b16 %v404
    %v444 = vunpack.c.l.b16 %v405
    %v445 = vunpack.c.l.b16 %v406
    %v446 = vunpack.c.l.b16 %v407
    %v447 = vunpack.c.l.b16 %v408
    %v448 = vunpack.c.l.b16 %v409
    %v449 = vunpack.c.l.b16 %v410
    %v450 = vpack.c.b16 %v435, %v434
    %v451 = vpack.c.b16 %v437, %v436
    %v452 = vpack.c.b16 %v439, %v438
    %v453 = vpack.c.b16 %v441, %v440
    %v454 = vpack.c.b16 %v443, %v442
    %v455 = vpack.c.b16 %v445, %v444
    %v456 = vpack.c.b16 %v447, %v446
    %v457 = vpack.c.b16 %v449, %v448
    %466 = vmatprep.subr.bf16.mxu0 0
    %467 = vmatpush1.bf16.msra.mxu0 %v457
    %468 = vmatprep.subr.bf16.mxu0 0
    %469 = vmatpush1.bf16.msra.mxu0 %v456
    %470 = vmatprep.subr.bf16.mxu0 0
    %471 = vmatpush1.bf16.msra.mxu0 %v455
    %472 = vmatprep.subr.bf16.mxu0 0
    %473 = vmatpush1.bf16.msra.mxu0 %v454
    %474 = vmatprep.subr.bf16.mxu0 0
    %475 = vmatpush1.bf16.msra.mxu0 %v453
    %476 = vmatprep.subr.bf16.mxu0 0
    %477 = vmatpush1.bf16.msra.mxu0 %v452
    %478 = vmatprep.subr.bf16.mxu0 0
    %479 = vmatpush1.bf16.msra.mxu0 %v451
    %480 = vmatprep.subr.bf16.mxu0 0
    %481 = vmatpush1.bf16.msra.mxu0 %v450
    %482 = vmatprep.subr.bf16.mxu0 0
    %483 = vmatpush2.bf16.msra.mxu0 0
    %484 = vmatprep.subr.bf16.mxu0 0
    %485 = vmatpush2.bf16.msra.mxu0 0
    %486 = vmatprep.subr.bf16.mxu0 0
    %487 = vmatpush2.bf16.msra.mxu0 0
    %488 = vmatprep.subr.bf16.mxu0 0
    %489 = vmatpush2.bf16.msra.mxu0 0
    %490 = vmatprep.subr.bf16.mxu0 0
    %491 = vmatpush2.bf16.msra.mxu0 0
    %492 = vmatprep.subr.bf16.mxu0 0
    %493 = vmatpush2.bf16.msra.mxu0 0
    %494 = vmatprep.subr.bf16.mxu0 0
    %495 = vmatpush2.bf16.msra.mxu0 0
    %496 = vmatprep.subr.bf16.mxu0 0
    %497 = vmatpush2.bf16.msra.mxu0 0
    %498 = vmatprep.mubr.bf16.mxu0 0
    %499 = vmatmul.mubr.bf16.gmra.mxu0 %v393
    %v500 = vpop.f32.mrf.mxu0
    %v501 = vadd.f32 %v416, %v500
    %v502 = vpop.f32.mrf.mxu0
    %v503 = vpop.f32.mrf.mxu0
    %v504 = vadd.f32 %v416, %v503
    %v505 = vpop.f32.mrf.mxu0
    %506 = vmatprep.mubr.bf16.mxu0 0
    %507 = vmatmul.mubr.bf16.gmra.mxu0 %v394
    %v508 = vpop.f32.mrf.mxu0
    %v509 = vadd.f32 %v416, %v508
    %v510 = vpop.f32.mrf.mxu0
    %v511 = vpop.f32.mrf.mxu0
    %v512 = vadd.f32 %v416, %v511
    %v513 = vpop.f32.mrf.mxu0
    %514 = vdwg.mxu0
    %v515 = vmax.f32 %v501, 0.0
    %v516 = vmax.f32 %v504, 0.0
    %v517 = vmax.f32 %v509, 0.0
    %v518 = vmax.f32 %v512, 0.0
    %v519 = vpack.c.bf16 %v516, %v515
    %v520 = vpack.c.bf16 %v518, %v517
    %v521 = vld [vmem:[#allocation4] sm:$0xf]
    %v522 = vld [vmem:[#allocation4 + $0x4] sm:$0xf]
    %v523 = vld [vmem:[#allocation4 + $0x8] sm:$0xf]
    %v524 = vld [vmem:[#allocation4 + $0xc] sm:$0xf]
    %v525 = vld [vmem:[#allocation4 + $0x10] sm:$0xf]
    %v526 = vld [vmem:[#allocation4 + $0x14] sm:$0xf]
    %v527 = vld [vmem:[#allocation4 + $0x18] sm:$0xf]
    %v528 = vld [vmem:[#allocation4 + $0x1c] sm:$0xf]
    %v529 = vld [vmem:[#allocation4 + $0x20] sm:$0xf]
    %v530 = vld [vmem:[#allocation4 + $0x24] sm:$0xf]
    %v531 = vld [vmem:[#allocation4 + $0x28] sm:$0xf]
    %v532 = vld [vmem:[#allocation4 + $0x2c] sm:$0xf]
    %v533 = vld [vmem:[#allocation4 + $0x30] sm:$0xf]
    %v534 = vld [vmem:[#allocation4 + $0x34] sm:$0xf]
    %v535 = vld [vmem:[#allocation4 + $0x38] sm:$0xf]
    %v536 = vld [vmem:[#allocation4 + $0x3c] sm:$0xf]
    %v537 = vld [vmem:[%s9] sm:$0x1]
    %v539 = vlaneseq
    %v540 = vshrl.u32 %v539, 7
    %v541 = vsub.s32 0, %v540
    %v542 = vrot.slane %v537, %v541
    %v560 = vunpack.c.l.b16 %v521
    %v561 = vunpack.c.l.b16 %v522
    %v562 = vunpack.c.l.b16 %v523
    %v563 = vunpack.c.l.b16 %v524
    %v564 = vunpack.c.l.b16 %v525
    %v565 = vunpack.c.l.b16 %v526
    %v566 = vunpack.c.l.b16 %v527
    %v567 = vunpack.c.l.b16 %v528
    %v568 = vunpack.c.l.b16 %v529
    %v569 = vunpack.c.l.b16 %v530
    %v570 = vunpack.c.l.b16 %v531
    %v571 = vunpack.c.l.b16 %v532
    %v572 = vunpack.c.l.b16 %v533
    %v573 = vunpack.c.l.b16 %v534
    %v574 = vunpack.c.l.b16 %v535
    %v575 = vunpack.c.l.b16 %v536
    %v576 = vpack.c.b16 %v561, %v560
    %v577 = vpack.c.b16 %v563, %v562
    %v578 = vpack.c.b16 %v565, %v564
    %v579 = vpack.c.b16 %v567, %v566
    %v580 = vpack.c.b16 %v569, %v568
    %v581 = vpack.c.b16 %v571, %v570
    %v582 = vpack.c.b16 %v573, %v572
    %v583 = vpack.c.b16 %v575, %v574
    %592 = vmatprep.subr.bf16.mxu0 0
    %593 = vmatpush1.bf16.msra.mxu0 %v583
    %594 = vmatprep.subr.bf16.mxu0 0
    %595 = vmatpush1.bf16.msra.mxu0 %v582
    %596 = vmatprep.subr.bf16.mxu0 0
    %597 = vmatpush1.bf16.msra.mxu0 %v581
    %598 = vmatprep.subr.bf16.mxu0 0
    %599 = vmatpush1.bf16.msra.mxu0 %v580
    %600 = vmatprep.subr.bf16.mxu0 0
    %601 = vmatpush1.bf16.msra.mxu0 %v579
    %602 = vmatprep.subr.bf16.mxu0 0
    %603 = vmatpush1.bf16.msra.mxu0 %v578
    %604 = vmatprep.subr.bf16.mxu0 0
    %605 = vmatpush1.bf16.msra.mxu0 %v577
    %606 = vmatprep.subr.bf16.mxu0 0
    %607 = vmatpush1.bf16.msra.mxu0 %v576
    %608 = vmatprep.subr.bf16.mxu0 0
    %609 = vmatpush2.bf16.msra.mxu0 0
    %610 = vmatprep.subr.bf16.mxu0 0
    %611 = vmatpush2.bf16.msra.mxu0 0
    %612 = vmatprep.subr.bf16.mxu0 0
    %613 = vmatpush2.bf16.msra.mxu0 0
    %614 = vmatprep.subr.bf16.mxu0 0
    %615 = vmatpush2.bf16.msra.mxu0 0
    %616 = vmatprep.subr.bf16.mxu0 0
    %617 = vmatpush2.bf16.msra.mxu0 0
    %618 = vmatprep.subr.bf16.mxu0 0
    %619 = vmatpush2.bf16.msra.mxu0 0
    %620 = vmatprep.subr.bf16.mxu0 0
    %621 = vmatpush2.bf16.msra.mxu0 0
    %622 = vmatprep.subr.bf16.mxu0 0
    %623 = vmatpush2.bf16.msra.mxu0 0
    %624 = vmatprep.mubr.bf16.mxu0 0
    %625 = vmatmul.mubr.bf16.gmra.mxu0 %v519
    %v626 = vpop.f32.mrf.mxu0
    %v627 = vadd.f32 %v542, %v626
    %v628 = vpop.f32.mrf.mxu0
    %v629 = vpop.f32.mrf.mxu0
    %v630 = vadd.f32 %v542, %v629
    %v631 = vpop.f32.mrf.mxu0
    %632 = vmatprep.mubr.bf16.mxu0 0
    %633 = vmatmul.mubr.bf16.gmra.mxu0 %v520
    %v634 = vpop.f32.mrf.mxu0
    %v635 = vadd.f32 %v542, %v634
    %v636 = vpop.f32.mrf.mxu0
    %v637 = vpop.f32.mrf.mxu0
    %v638 = vadd.f32 %v542, %v637
    %v639 = vpop.f32.mrf.mxu0
    %640 = vdwg.mxu0
    %v641 = vxor.u32 %v627, 2147483648
    %v642 = vxor.u32 %v630, 2147483648
    %v643 = vxor.u32 %v635, 2147483648
    %v644 = vxor.u32 %v638, 2147483648
    %v645 = vmul.f32 %v641, 1.442695
    %v646 = vpow.pop %v645
    %v647 = vmul.f32 %v642, 1.442695
    %v648 = vpow.pop %v647
    %v649 = vmul.f32 %v643, 1.442695
    %v650 = vpow.pop %v649
    %v651 = vmul.f32 %v644, 1.442695
    %v652 = vpow.pop %v651
    %v653 = vadd.f32 %v646, 1.0
    %v654 = vadd.f32 %v648, 1.0
    %v655 = vadd.f32 %v650, 1.0
    %v656 = vadd.f32 %v652, 1.0
    %v657 = vrcp.pop %v653
    %v658 = vmul.f32 1.0, %v657
    %v659 = vrcp.pop %v654
    %v660 = vmul.f32 1.0, %v659
    %v661 = vrcp.pop %v655
    %v662 = vmul.f32 1.0, %v661
    %v663 = vrcp.pop %v656
    %v664 = vmul.f32 1.0, %v663
    %665 = vst [vmem:[%s10] sm:$0xff] %v658
    %666 = vst [vmem:[%s10 + $0x8] sm:$0xff] %v660
    %667 = vst [vmem:[%s10 + $0x10] sm:$0xff] %v662
    %668 = vst [vmem:[%s10 + $0x18] sm:$0xff] %v664
    %669 = vst [vmem:[%s11] sm:$0xff] %v351
    %670 = vst [vmem:[%s11 + $0x8] sm:$0xff] %v353
    %671 = vst [vmem:[%s11 + $0x10] sm:$0xff] %v355
    %672 = vst [vmem:[%s11 + $0x18] sm:$0xff] %v357
    %673 = vst [vmem:[%s11 + $0x20] sm:$0xff] %v361
    %674 = vst [vmem:[%s11 + $0x28] sm:$0xff] %v363
    %675 = vst [vmem:[%s11 + $0x30] sm:$0xff] %v365
    %676 = vst [vmem:[%s11 + $0x38] sm:$0xff] %v367
    // Predicated region
    $region50: #{vae_forward.1} parent=1 // pred_check
      _
    $region51: #{vae_forward.1} parent=1 // pred_check_branch
      %678 = sbr.rel (0) target = $region53
    $region52: #{vae_forward.1} parent=1 // pred_region
      _
    $region53: #{vae_forward.1} parent=1 // pred_fallthru
      _
    // Predicated region
    $region54: #{vae_forward.1} parent=1 // pred_check
      _
    $region55: #{vae_forward.1} parent=1 // pred_check_branch
      %680 = sbr.rel (0) target = $region57
    $region56: #{vae_forward.1} parent=1 // pred_region
      _
    $region57: #{vae_forward.1} parent=1 // pred_fallthru
      _
    // Predicated region
    $region58: #{vae_forward.1} parent=1 // pred_check
      _
    $region59: #{vae_forward.1} parent=1 // pred_check_branch
      %682 = sbr.rel (0) target = $region61
    $region60: #{vae_forward.1} parent=1 // pred_region
      _
    $region61: #{vae_forward.1} parent=1 // pred_fallthru
      _
    // Predicated region
    $region62: #{vae_forward.1} parent=1 // pred_check
      _
    $region63: #{vae_forward.1} parent=1 // pred_check_branch
      %684 = sbr.rel (0) target = $region65
    $region64: #{vae_forward.1} parent=1 // pred_region
      _
    $region65: #{vae_forward.1} parent=1 // pred_fallthru
      _
    %685 = vsyncpa [#allocation3], 1
    %686 = vsyncpa [#allocation5], 1

</llo_original>
